<compile_context>
chip_gen: v7x
topology: tpu7x:2x2x1
jax: 0.10.0
libtpu: 0.0.40
codegen_flags: <defaults>
</compile_context>

<pallas_src>
import jax
import jax.numpy as jnp
from jax.experimental import pallas as pl
from jax.experimental.pallas import tpu as pltpu


PF = 32                 # predictive_factor
EMB = 2 * PF            # 64
MLP_IN = 6 * PF         # 192
H1 = 2 * PF             # 64
H2 = PF                 # 32
H3 = PF // 2            # 16


def _round_up(x, m):
    return (x + m - 1) // m * m


def _ncf_kernel(mlp_in_ref, user_gmf_ref, gmf_item_ref,
                w1_ref, b1_ref, w2_ref, b2_ref, w3_ref, b3_ref,
                wg_ref, wm_ref, bout_ref, out_ref):
    f32 = jnp.float32
    bf16 = jnp.bfloat16

    # ---- MLP tower: single K=192 dot on the contiguous slab (bf16 in, f32 accumulate) ----
    x = mlp_in_ref[...]                                                       # [TB, 192] bf16
    h1 = jnp.dot(x, w1_ref[...], preferred_element_type=f32) + b1_ref[...]
    h1 = jnp.maximum(h1, 0.0)                                                 # [TB, 64] f32
    h2 = jnp.dot(h1.astype(bf16), w2_ref[...], preferred_element_type=f32) + b2_ref[...]
    h2 = jnp.maximum(h2, 0.0)                                                 # [TB, 32] f32
    h3 = jnp.dot(h2.astype(bf16), w3_ref[...], preferred_element_type=f32) + b3_ref[...]
    mlp_vec = jnp.maximum(h3, 0.0)                                            # [TB, 16] f32

    # ---- GMF tower: elementwise product in f32 (v5e-safe) ----
    gmf_vec = user_gmf_ref[...].astype(f32) * gmf_item_ref[...].astype(f32)   # [TB, 64] f32

    # ---- blended output projection: VPU multiply + XLU lane reduction (not an N=1 matmul) ----
    out = (jnp.sum(gmf_vec * wg_ref[...], axis=-1, keepdims=True)
           + jnp.sum(mlp_vec * wm_ref[...], axis=-1, keepdims=True)
           + bout_ref[...])                                                   # [TB, 1] f32
    # NOTE: (TB, 1) output => masked partial stores; writeback volume is negligible here, but
    # keep the last dim a multiple of 128 if the output ever grows lane-wise.
    out_ref[...] = out


def ncf_server_forward(user_mlp, context, user_gmf, item_ids, params, *, tb=1024):
    """user_mlp / context / user_gmf: [B, 64] f32; item_ids: [B] int32. Returns [B, 1] f32."""
    f32, bf16 = jnp.float32, jnp.bfloat16
    B = user_mlp.shape[0]

    # Embedding gathers + concat + bf16 cast (XLA glue, fused into one [B,192] bf16 slab write).
    # TODO(synk): a fully in-kernel embedding gather needs per-row DMAs (descriptor-issue bound)
    # or a VMEM-resident table, so the row gather stays as XLA glue here.
    mlp_item = jnp.take(params["mlp_item_emb"], item_ids, axis=0)             # [B, 64]
    gmf_item = jnp.take(params["gmf_item_emb"], item_ids, axis=0)             # [B, 64]
    mlp_in = jnp.concatenate([user_mlp, mlp_item, context], axis=-1).astype(bf16)   # [B, 192]
    user_gmf_b = user_gmf.astype(bf16)
    gmf_item_b = gmf_item.astype(bf16)

    # Batch tile: multiple of 16 (bf16 sublane packing); capped so double-buffered activations
    # stay far below v7x's 64 MiB VMEM / 32 MiB scoped default.
    TB = min(_round_up(max(tb, 16), 16), 1 << 14)
    TB = min(TB, _round_up(B, 16))
    Bp = _round_up(B, TB)

    def pad(a):
        return a if a.shape[0] == Bp else jnp.pad(a, ((0, Bp - a.shape[0]), (0, 0)))

    mlp_in, user_gmf_b, gmf_item_b = pad(mlp_in), pad(user_gmf_b), pad(gmf_item_b)

    # Matmul weights travel as bf16 (MXU-native path); biases / blend rows stay f32.
    w1 = params["w1t"].astype(bf16)           # [192, 64]
    w2 = params["w2t"].astype(bf16)           # [64, 32]
    w3 = params["w3t"].astype(bf16)           # [32, 16]
    b1, b2, b3 = params["b1"], params["b2"], params["b3"]
    wg, wm, bout = params["w_out_gmf"], params["w_out_mlp"], params["b_out"]

    def act_spec(feat):
        return pl.BlockSpec((TB, feat), lambda i: (i, 0))

    def res_spec(shape):   # VMEM-resident (same block every step => no re-DMA)
        return pl.BlockSpec(shape, lambda i: (0, 0))

    weight_bytes = (MLP_IN * H1 + H1 * H2 + H2 * H3) * 2 + (H1 + H2 + H3 + EMB + H3 + 1) * 4
    cost = pl.CostEstimate(
        flops=2 * Bp * (MLP_IN * H1 + H1 * H2 + H2 * H3 + 2 * EMB + 2 * H3),
        transcendentals=0,
        bytes_accessed=Bp * (MLP_IN + 2 * EMB) * 2 + Bp * 4 + weight_bytes,
    )

    out = pl.pallas_call(
        _ncf_kernel,
        out_shape=jax.ShapeDtypeStruct((Bp, 1), f32),
        grid_spec=pltpu.PrefetchScalarGridSpec(
            num_scalar_prefetch=0,
            grid=(Bp // TB,),
            in_specs=[
                act_spec(MLP_IN), act_spec(EMB), act_spec(EMB),
                res_spec((MLP_IN, H1)), res_spec((1, H1)),
                res_spec((H1, H2)), res_spec((1, H2)),
                res_spec((H2, H3)), res_spec((1, H3)),
                res_spec((1, EMB)), res_spec((1, H3)), res_spec((1, 1)),
            ],
            out_specs=pl.BlockSpec((TB, 1), lambda i: (i, 0)),
        ),
        compiler_params=pltpu.CompilerParams(
            dimension_semantics=("parallel",),        # shard batch tiles across v7x's 2 TCs
            vmem_limit_bytes=32 * 1024 * 1024,
        ),
        cost_estimate=cost,
    )(mlp_in, user_gmf_b, gmf_item_b, w1, b1, w2, b2, w3, b3, wg, wm, bout)

    return out[:B]


def init_params(key, item_num):
    """Deterministic parameter init mirroring the torch module's __init__."""
    ks = jax.random.split(key, 11)

    def xavier_uniform(k, fan_in, fan_out):
        a = jnp.sqrt(6.0 / (fan_in + fan_out))
        return jax.random.uniform(k, (fan_out, fan_in), jnp.float32, -a, a)

    def kaiming_uniform_a1(k, fan_in, fan_out):
        bound = jnp.sqrt(3.0 / fan_in)    # kaiming_uniform with a=1 -> sqrt(6 / (2*fan_in))
        return jax.random.uniform(k, (fan_out, fan_in), jnp.float32, -bound, bound)

    def linear_bias(k, fan_in, fan_out):
        bound = 1.0 / jnp.sqrt(fan_in)
        return jax.random.uniform(k, (fan_out,), jnp.float32, -bound, bound)

    mlp_item_emb = 0.01 * jax.random.normal(ks[0], (item_num, EMB), jnp.float32)
    gmf_item_emb = 0.01 * jax.random.normal(ks[1], (item_num, EMB), jnp.float32)

    w1 = xavier_uniform(ks[2], MLP_IN, H1); b1 = linear_bias(ks[3], MLP_IN, H1)
    w2 = xavier_uniform(ks[4], H1, H2);     b2 = linear_bias(ks[5], H1, H2)
    w3 = xavier_uniform(ks[6], H2, H3);     b3 = linear_bias(ks[7], H2, H3)

    gmf_out_w = kaiming_uniform_a1(ks[8], EMB, 1)   # [1, 64] (kaiming overwrites the `ones` init)
    mlp_out_w = kaiming_uniform_a1(ks[9], H3, 1)    # [1, 16]
    # output_logits = Linear(2pf, 1): its bias is drawn with fan_in = 2pf = 64 at construction,
    # BEFORE join_output_weights swaps in the [1, 80] weight — so fan_in=EMB matches torch.
    out_bias = linear_bias(ks[10], EMB, 1)

    return {
        "mlp_item_emb": mlp_item_emb,
        "gmf_item_emb": gmf_item_emb,
        "w1t": w1.T, "b1": b1.reshape(1, H1),
        "w2t": w2.T, "b2": b2.reshape(1, H2),
        "w3t": w3.T, "b3": b3.reshape(1, H3),
        # join_output_weights(): cat(0.5*gmf_out.w, 0.5*mlp_out.w), kept as its two rows so the
        # kernel can blend on the VPU instead of running an N=1 matmul.
        "w_out_gmf": 0.5 * gmf_out_w,     # [1, 64]
        "w_out_mlp": 0.5 * mlp_out_w,     # [1, 16]
        "b_out": out_bias.reshape(1, 1),  # [1, 1]
    }


def reference_forward(user_mlp, context, user_gmf, item_ids, p):
    """Pure-JAX reference mirroring the kernel's mixed precision (bf16 operands, f32 accum)."""
    f32, bf16 = jnp.float32, jnp.bfloat16
    mlp_item = jnp.take(p["mlp_item_emb"], item_ids, axis=0)
    gmf_item = jnp.take(p["gmf_item_emb"], item_ids, axis=0)
    x = jnp.concatenate([user_mlp, mlp_item, context], axis=-1).astype(bf16)
    w1, w2, w3 = p["w1t"].astype(bf16), p["w2t"].astype(bf16), p["w3t"].astype(bf16)
    h1 = jnp.maximum(jnp.dot(x, w1, preferred_element_type=f32) + p["b1"], 0.0)
    h2 = jnp.maximum(jnp.dot(h1.astype(bf16), w2, preferred_element_type=f32) + p["b2"], 0.0)
    mlp_vec = jnp.maximum(jnp.dot(h2.astype(bf16), w3, preferred_element_type=f32) + p["b3"], 0.0)
    gmf_vec = user_gmf.astype(bf16).astype(f32) * gmf_item.astype(bf16).astype(f32)
    return (jnp.sum(gmf_vec * p["w_out_gmf"], axis=-1, keepdims=True)
            + jnp.sum(mlp_vec * p["w_out_mlp"], axis=-1, keepdims=True)
            + p["b_out"])


if __name__ == "__main__":
    key = jax.random.PRNGKey(0)
    k_param, k_in = jax.random.split(key)
    item_num = 50
    B = 8

    params = init_params(k_param, item_num)

    k1, k2, k3, k4 = jax.random.split(k_in, 4)
    item_ids = jax.random.randint(k1, (B,), 0, item_num, dtype=jnp.int32)
    user_mlp = jax.random.normal(k2, (B, EMB), jnp.float32)
    context = jax.random.normal(k3, (B, EMB), jnp.float32)
    user_gmf = jax.random.normal(k4, (B, EMB), jnp.float32)

    forward = jax.jit(ncf_server_forward, static_argnames=("tb",))
    out = jax.block_until_ready(forward(user_mlp, context, user_gmf, item_ids, params))

    ref = reference_forward(user_mlp, context, user_gmf, item_ids, params)
    assert out.shape == (B, 1), out.shape
    assert jnp.allclose(out, ref, atol=1e-4, rtol=1e-4), (out, ref)

    # TODO(synk): the literal torch forward() is a stub returning tensor(0.0); this kernel
    # implements the NCF forward implied by the module's layer structure.
    print("KERNEL_OK")
</pallas_src>

<mosaic_0001>
module attributes {stable_mosaic.version = 11 : i64} {
  func.func @_ncf_kernel(%arg0: i32, %arg1: memref<16x192xbf16, #tpu.memory_space<vmem>>, %arg2: memref<16x64xbf16, #tpu.memory_space<vmem>>, %arg3: memref<16x64xbf16, #tpu.memory_space<vmem>>, %arg4: memref<192x64xbf16, #tpu.memory_space<vmem>>, %arg5: memref<1x64xf32, #tpu.memory_space<vmem>>, %arg6: memref<64x32xbf16, #tpu.memory_space<vmem>>, %arg7: memref<1x32xf32, #tpu.memory_space<vmem>>, %arg8: memref<32x16xbf16, #tpu.memory_space<vmem>>, %arg9: memref<1x16xf32, #tpu.memory_space<vmem>>, %arg10: memref<1x64xf32, #tpu.memory_space<vmem>>, %arg11: memref<1x16xf32, #tpu.memory_space<vmem>>, %arg12: memref<1x1xf32, #tpu.memory_space<vmem>>, %arg13: memref<16x1xf32, #tpu.memory_space<vmem>>) attributes {dimension_semantics = [#tpu.dimension_semantics<parallel>], iteration_bounds = array<i64: 1>, scalar_prefetch = 0 : i64, scratch_operands = 0 : i64, tpu.core_type = #tpu.core_type<tc>, window_params = [{transform_indices = @transform_0, window_bounds = array<i64: 16, 192>}, {transform_indices = @transform_1, window_bounds = array<i64: 16, 64>}, {transform_indices = @transform_2, window_bounds = array<i64: 16, 64>}, {pipeline_mode = #tpu.pipeline_mode<synchronous>, transform_indices = @transform_3, window_bounds = array<i64: 192, 64>}, {pipeline_mode = #tpu.pipeline_mode<synchronous>, transform_indices = @transform_4, window_bounds = array<i64: 1, 64>}, {pipeline_mode = #tpu.pipeline_mode<synchronous>, transform_indices = @transform_5, window_bounds = array<i64: 64, 32>}, {pipeline_mode = #tpu.pipeline_mode<synchronous>, transform_indices = @transform_6, window_bounds = array<i64: 1, 32>}, {pipeline_mode = #tpu.pipeline_mode<synchronous>, transform_indices = @transform_7, window_bounds = array<i64: 32, 16>}, {pipeline_mode = #tpu.pipeline_mode<synchronous>, transform_indices = @transform_8, window_bounds = array<i64: 1, 16>}, {pipeline_mode = #tpu.pipeline_mode<synchronous>, transform_indices = @transform_9, window_bounds = array<i64: 1, 64>}, {pipeline_mode = #tpu.pipeline_mode<synchronous>, transform_indices = @transform_10, window_bounds = array<i64: 1, 16>}, {pipeline_mode = #tpu.pipeline_mode<synchronous>, transform_indices = @transform_11, window_bounds = array<i64: 1, 1>}, {transform_indices = @transform_12, window_bounds = array<i64: 16, 1>}]} {
    %c0 = arith.constant 0 : index
    %c0_0 = arith.constant 0 : index
    %0 = vector.load %arg1[%c0, %c0_0] : memref<16x192xbf16, #tpu.memory_space<vmem>>, vector<16x192xbf16>
    %c0_1 = arith.constant 0 : index
    %c0_2 = arith.constant 0 : index
    %1 = vector.load %arg4[%c0_1, %c0_2] : memref<192x64xbf16, #tpu.memory_space<vmem>>, vector<192x64xbf16>
    %cst = arith.constant dense<0.000000e+00> : vector<16x64xf32>
    %2 = tpu.matmul %0, %1, %cst {dimension_numbers = #tpu.dot_dimension_numbers<[1], [0], [0], [1], [0, 0, 1, 1], [], []>} : vector<16x192xbf16>, vector<192x64xbf16>, vector<16x64xf32> -> vector<16x64xf32>
    %c0_3 = arith.constant 0 : index
    %c0_4 = arith.constant 0 : index
    %3 = vector.load %arg5[%c0_3, %c0_4] : memref<1x64xf32, #tpu.memory_space<vmem>>, vector<1x64xf32>
    %4 = vector.broadcast %3 : vector<1x64xf32> to vector<16x64xf32>
    %5 = arith.addf %2, %4 : vector<16x64xf32>
    %cst_5 = arith.constant 0.000000e+00 : f32
    %6 = vector.broadcast %cst_5 : f32 to vector<16x64xf32>
    %7 = arith.maximumf %5, %6 : vector<16x64xf32>
    %8 = arith.truncf %7 : vector<16x64xf32> to vector<16x64xbf16>
    %c0_6 = arith.constant 0 : index
    %c0_7 = arith.constant 0 : index
    %9 = vector.load %arg6[%c0_6, %c0_7] : memref<64x32xbf16, #tpu.memory_space<vmem>>, vector<64x32xbf16>
    %cst_8 = arith.constant dense<0.000000e+00> : vector<16x32xf32>
    %10 = tpu.matmul %8, %9, %cst_8 {dimension_numbers = #tpu.dot_dimension_numbers<[1], [0], [0], [1], [0, 0, 1, 1], [], []>} : vector<16x64xbf16>, vector<64x32xbf16>, vector<16x32xf32> -> vector<16x32xf32>
    %c0_9 = arith.constant 0 : index
    %c0_10 = arith.constant 0 : index
    %11 = vector.load %arg7[%c0_9, %c0_10] : memref<1x32xf32, #tpu.memory_space<vmem>>, vector<1x32xf32>
    %12 = vector.broadcast %11 : vector<1x32xf32> to vector<16x32xf32>
    %13 = arith.addf %10, %12 : vector<16x32xf32>
    %cst_11 = arith.constant 0.000000e+00 : f32
    %14 = vector.broadcast %cst_11 : f32 to vector<16x32xf32>
    %15 = arith.maximumf %13, %14 : vector<16x32xf32>
    %16 = arith.truncf %15 : vector<16x32xf32> to vector<16x32xbf16>
    %c0_12 = arith.constant 0 : index
    %c0_13 = arith.constant 0 : index
    %17 = vector.load %arg8[%c0_12, %c0_13] : memref<32x16xbf16, #tpu.memory_space<vmem>>, vector<32x16xbf16>
    %cst_14 = arith.constant dense<0.000000e+00> : vector<16x16xf32>
    %18 = tpu.matmul %16, %17, %cst_14 {dimension_numbers = #tpu.dot_dimension_numbers<[1], [0], [0], [1], [0, 0, 1, 1], [], []>} : vector<16x32xbf16>, vector<32x16xbf16>, vector<16x16xf32> -> vector<16x16xf32>
    %c0_15 = arith.constant 0 : index
    %c0_16 = arith.constant 0 : index
    %19 = vector.load %arg9[%c0_15, %c0_16] : memref<1x16xf32, #tpu.memory_space<vmem>>, vector<1x16xf32>
    %20 = vector.broadcast %19 : vector<1x16xf32> to vector<16x16xf32>
    %21 = arith.addf %18, %20 : vector<16x16xf32>
    %cst_17 = arith.constant 0.000000e+00 : f32
    %22 = vector.broadcast %cst_17 : f32 to vector<16x16xf32>
    %23 = arith.maximumf %21, %22 : vector<16x16xf32>
    %c0_18 = arith.constant 0 : index
    %c0_19 = arith.constant 0 : index
    %24 = vector.load %arg2[%c0_18, %c0_19] : memref<16x64xbf16, #tpu.memory_space<vmem>>, vector<16x64xbf16>
    %25 = arith.extf %24 : vector<16x64xbf16> to vector<16x64xf32>
    %c0_20 = arith.constant 0 : index
    %c0_21 = arith.constant 0 : index
    %26 = vector.load %arg3[%c0_20, %c0_21] : memref<16x64xbf16, #tpu.memory_space<vmem>>, vector<16x64xbf16>
    %27 = arith.extf %26 : vector<16x64xbf16> to vector<16x64xf32>
    %28 = arith.mulf %25, %27 : vector<16x64xf32>
    %c0_22 = arith.constant 0 : index
    %c0_23 = arith.constant 0 : index
    %29 = vector.load %arg10[%c0_22, %c0_23] : memref<1x64xf32, #tpu.memory_space<vmem>>, vector<1x64xf32>
    %30 = vector.broadcast %29 : vector<1x64xf32> to vector<16x64xf32>
    %31 = arith.mulf %28, %30 : vector<16x64xf32>
    %cst_24 = arith.constant dense<0.000000e+00> : vector<16xf32>
    %32 = vector.multi_reduction <add>, %31, %cst_24 [1] : vector<16x64xf32> to vector<16xf32>
    %33 = vector.shape_cast %32 : vector<16xf32> to vector<16x1xf32>
    %c0_25 = arith.constant 0 : index
    %c0_26 = arith.constant 0 : index
    %34 = vector.load %arg11[%c0_25, %c0_26] : memref<1x16xf32, #tpu.memory_space<vmem>>, vector<1x16xf32>
    %35 = vector.broadcast %34 : vector<1x16xf32> to vector<16x16xf32>
    %36 = arith.mulf %23, %35 : vector<16x16xf32>
    %cst_27 = arith.constant dense<0.000000e+00> : vector<16xf32>
    %37 = vector.multi_reduction <add>, %36, %cst_27 [1] : vector<16x16xf32> to vector<16xf32>
    %38 = vector.shape_cast %37 : vector<16xf32> to vector<16x1xf32>
    %39 = arith.addf %33, %38 : vector<16x1xf32>
    %c0_28 = arith.constant 0 : index
    %c0_29 = arith.constant 0 : index
    %40 = vector.load %arg12[%c0_28, %c0_29] : memref<1x1xf32, #tpu.memory_space<vmem>>, vector<1x1xf32>
    %41 = vector.broadcast %40 : vector<1x1xf32> to vector<16x1xf32>
    %42 = arith.addf %39, %41 : vector<16x1xf32>
    %c0_30 = arith.constant 0 : index
    %c0_31 = arith.constant 0 : index
    %43 = vector.load %arg13[%c0_30, %c0_31] : memref<16x1xf32, #tpu.memory_space<vmem>>, vector<16x1xf32>
    tpu.vector_store %arg13[%c0_30, %c0_31], %42 {strides = array<i32>} : memref<16x1xf32, #tpu.memory_space<vmem>>, vector<16x1xf32>,
    return
  }
  func.func @transform_0(%arg0: i32) -> (i32, i32) {
    %c0_i32 = arith.constant 0 : i32
    %c0_i32_0 = arith.constant 0 : i32
    return %arg0, %c0_i32 : i32, i32
  }
  func.func @transform_1(%arg0: i32) -> (i32, i32) {
    %c0_i32 = arith.constant 0 : i32
    %c0_i32_0 = arith.constant 0 : i32
    return %arg0, %c0_i32 : i32, i32
  }
  func.func @transform_2(%arg0: i32) -> (i32, i32) {
    %c0_i32 = arith.constant 0 : i32
    %c0_i32_0 = arith.constant 0 : i32
    return %arg0, %c0_i32 : i32, i32
  }
  func.func @transform_3(%arg0: i32) -> (i32, i32) {
    %c0_i32 = arith.constant 0 : i32
    %c0_i32_0 = arith.constant 0 : i32
    %c0_i32_1 = arith.constant 0 : i32
    return %c0_i32, %c0_i32_0 : i32, i32
  }
  func.func @transform_4(%arg0: i32) -> (i32, i32) {
    %c0_i32 = arith.constant 0 : i32
    %c0_i32_0 = arith.constant 0 : i32
    %c0_i32_1 = arith.constant 0 : i32
    return %c0_i32, %c0_i32_0 : i32, i32
  }
  func.func @transform_5(%arg0: i32) -> (i32, i32) {
    %c0_i32 = arith.constant 0 : i32
    %c0_i32_0 = arith.constant 0 : i32
    %c0_i32_1 = arith.constant 0 : i32
    return %c0_i32, %c0_i32_0 : i32, i32
  }
  func.func @transform_6(%arg0: i32) -> (i32, i32) {
    %c0_i32 = arith.constant 0 : i32
    %c0_i32_0 = arith.constant 0 : i32
    %c0_i32_1 = arith.constant 0 : i32
    return %c0_i32, %c0_i32_0 : i32, i32
  }
  func.func @transform_7(%arg0: i32) -> (i32, i32) {
    %c0_i32 = arith.constant 0 : i32
    %c0_i32_0 = arith.constant 0 : i32
    %c0_i32_1 = arith.constant 0 : i32
    return %c0_i32, %c0_i32_0 : i32, i32
  }
  func.func @transform_8(%arg0: i32) -> (i32, i32) {
    %c0_i32 = arith.constant 0 : i32
    %c0_i32_0 = arith.constant 0 : i32
    %c0_i32_1 = arith.constant 0 : i32
    return %c0_i32, %c0_i32_0 : i32, i32
  }
  func.func @transform_9(%arg0: i32) -> (i32, i32) {
    %c0_i32 = arith.constant 0 : i32
    %c0_i32_0 = arith.constant 0 : i32
    %c0_i32_1 = arith.constant 0 : i32
    return %c0_i32, %c0_i32_0 : i32, i32
  }
  func.func @transform_10(%arg0: i32) -> (i32, i32) {
    %c0_i32 = arith.constant 0 : i32
    %c0_i32_0 = arith.constant 0 : i32
    %c0_i32_1 = arith.constant 0 : i32
    return %c0_i32, %c0_i32_0 : i32, i32
  }
  func.func @transform_11(%arg0: i32) -> (i32, i32) {
    %c0_i32 = arith.constant 0 : i32
    %c0_i32_0 = arith.constant 0 : i32
    %c0_i32_1 = arith.constant 0 : i32
    return %c0_i32, %c0_i32_0 : i32, i32
  }
  func.func @transform_12(%arg0: i32) -> (i32, i32) {
    %c0_i32 = arith.constant 0 : i32
    %c0_i32_0 = arith.constant 0 : i32
    return %arg0, %c0_i32 : i32, i32
  }
}

</mosaic_0001>

<llo_original>
// kernel: ncf_server_forward.1
$region0: #{ncf_server_forward.1}
  #allocation0 [shape = 'u32[]', space=smem, size = 0x4, offset = 0x4, fixed_abs, tag = 'smem constant byte address 0x4 - core index']
  #allocation1 [shape = 'u32[144,128]{1,0:T(1,128)}', space=vmem, size = 0x12000, scoped, tag = 'internal scratch']
  #allocation2 [shape = 'f32[1,1]{1,0:T(1,128)S(1)}', space=vmem, size = 0x200, scoped, tag = 'scoped memory for ncf_server_forward.1']
  %s0 = inlined_call_operand.vmem [shape: bf16[16,192], index: 0, kind: input, shape index: {}]
  %s1 = inlined_call_operand.vmem [shape: bf16[16,64], index: 1, kind: input, shape index: {}]
  %s2 = inlined_call_operand.vmem [shape: bf16[16,64], index: 2, kind: input, shape index: {}]
  %s3 = inlined_call_operand.vmem [shape: bf16[192,64], index: 3, kind: input, shape index: {}]
  %s4 = inlined_call_operand.vmem [shape: f32[1,64], index: 4, kind: input, shape index: {}]
  %s5 = inlined_call_operand.vmem [shape: bf16[64,32], index: 5, kind: input, shape index: {}]
  %s6 = inlined_call_operand.vmem [shape: f32[1,32], index: 6, kind: input, shape index: {}]
  %s7 = inlined_call_operand.vmem [shape: bf16[32,16], index: 7, kind: input, shape index: {}]
  %s8 = inlined_call_operand.vmem [shape: f32[1,16], index: 8, kind: input, shape index: {}]
  %s9 = inlined_call_operand.vmem [shape: f32[1,64], index: 9, kind: input, shape index: {}]
  %s10 = inlined_call_operand.vmem [shape: f32[1,16], index: 10, kind: input, shape index: {}]
  %s11 = inlined_call_operand.<no memory space> [shape: f32[1,1], index: 11, kind: input, shape index: {}]
  %s12 = inlined_call_operand.vmem [shape: f32[16,1], index: 12, kind: output, shape index: {}]
  %s13 = sld [smem:[#allocation0]]
  $region58: #{ncf_server_forward.1} parent=0
    _
  %s15 = ssub.s32 1, %s13
  %s16 = scalar_select 0, %s15, %s13
  %v17 = vstv %s11
  %18 = vst [vmem:[#allocation2] sm:$0x1] %v17
  // Predicated region
  $region2: #{ncf_server_forward.1} parent=0 // pred_check
    _
  $region3: #{ncf_server_forward.1} parent=0 // pred_check_branch
    %20 = sbr.rel (0) target = $region5
  $region4: #{ncf_server_forward.1} parent=0 // pred_region
    _
  $region5: #{ncf_server_forward.1} parent=0 // pred_fallthru
    _
  // Predicated region
  $region6: #{ncf_server_forward.1} parent=0 // pred_check
    _
  $region7: #{ncf_server_forward.1} parent=0 // pred_check_branch
    %22 = sbr.rel (0) target = $region9
  $region8: #{ncf_server_forward.1} parent=0 // pred_region
    _
  $region9: #{ncf_server_forward.1} parent=0 // pred_fallthru
    _
  // Predicated region
  $region10: #{ncf_server_forward.1} parent=0 // pred_check
    _
  $region11: #{ncf_server_forward.1} parent=0 // pred_check_branch
    %24 = sbr.rel (0) target = $region13
  $region12: #{ncf_server_forward.1} parent=0 // pred_region
    _
  $region13: #{ncf_server_forward.1} parent=0 // pred_fallthru
    _
  // Predicated region
  $region14: #{ncf_server_forward.1} parent=0 // pred_check
    _
  $region15: #{ncf_server_forward.1} parent=0 // pred_check_branch
    %26 = sbr.rel (0) target = $region17
  $region16: #{ncf_server_forward.1} parent=0 // pred_region
    _
  $region17: #{ncf_server_forward.1} parent=0 // pred_fallthru
    _
  // Predicated region
  $region18: #{ncf_server_forward.1} parent=0 // pred_check
    _
  $region19: #{ncf_server_forward.1} parent=0 // pred_check_branch
    %28 = sbr.rel (0) target = $region21
  $region20: #{ncf_server_forward.1} parent=0 // pred_region
    _
  $region21: #{ncf_server_forward.1} parent=0 // pred_fallthru
    _
  // Predicated region
  $region22: #{ncf_server_forward.1} parent=0 // pred_check
    _
  $region23: #{ncf_server_forward.1} parent=0 // pred_check_branch
    %30 = sbr.rel (0) target = $region25
  $region24: #{ncf_server_forward.1} parent=0 // pred_region
    _
  $region25: #{ncf_server_forward.1} parent=0 // pred_fallthru
    _
  // Predicated region
  $region26: #{ncf_server_forward.1} parent=0 // pred_check
    _
  $region27: #{ncf_server_forward.1} parent=0 // pred_check_branch
    %32 = sbr.rel (0) target = $region29
  $region28: #{ncf_server_forward.1} parent=0 // pred_region
    _
  $region29: #{ncf_server_forward.1} parent=0 // pred_fallthru
    _
  // Predicated region
  $region30: #{ncf_server_forward.1} parent=0 // pred_check
    _
  $region31: #{ncf_server_forward.1} parent=0 // pred_check_branch
    %34 = sbr.rel (0) target = $region33
  $region32: #{ncf_server_forward.1} parent=0 // pred_region
    _
  $region33: #{ncf_server_forward.1} parent=0 // pred_fallthru
    _
  // Predicated region
  $region34: #{ncf_server_forward.1} parent=0 // pred_check
    _
  $region35: #{ncf_server_forward.1} parent=0 // pred_check_branch
    %36 = sbr.rel (0) target = $region37
  $region36: #{ncf_server_forward.1} parent=0 // pred_region
    _
  $region37: #{ncf_server_forward.1} parent=0 // pred_fallthru
    _
  // Predicated region
  $region38: #{ncf_server_forward.1} parent=0 // pred_check
    _
  $region39: #{ncf_server_forward.1} parent=0 // pred_check_branch
    %38 = sbr.rel (0) target = $region41
  $region40: #{ncf_server_forward.1} parent=0 // pred_region
    _
  $region41: #{ncf_server_forward.1} parent=0 // pred_fallthru
    _
  // Predicated region
  $region42: #{ncf_server_forward.1} parent=0 // pred_check
    _
  $region43: #{ncf_server_forward.1} parent=0 // pred_check_branch
    %40 = sbr.rel (0) target = $region45
  $region44: #{ncf_server_forward.1} parent=0 // pred_region
    _
  $region45: #{ncf_server_forward.1} parent=0 // pred_fallthru
    _
  // Predicated region
  $region46: #{ncf_server_forward.1} parent=0 // pred_check
    _
  $region47: #{ncf_server_forward.1} parent=0 // pred_check_branch
    %42 = sbr.rel (0) target = $region49
  $region48: #{ncf_server_forward.1} parent=0 // pred_region
    _
  $region49: #{ncf_server_forward.1} parent=0 // pred_fallthru
    _
  %v44 = vld [vmem:[%s0] sm:$0xff]
  %v45 = vld [vmem:[%s0 + $0x8] sm:$0xff]
  %v46 = vld [vmem:[%s3] sm:$0xf]
  %v47 = vld [vmem:[%s3 + $0x4] sm:$0xf]
  %v48 = vld [vmem:[%s3 + $0x8] sm:$0xf]
  %v49 = vld [vmem:[%s3 + $0xc] sm:$0xf]
  %v50 = vld [vmem:[%s3 + $0x10] sm:$0xf]
  %v51 = vld [vmem:[%s3 + $0x14] sm:$0xf]
  %v52 = vld [vmem:[%s3 + $0x18] sm:$0xf]
  %v53 = vld [vmem:[%s3 + $0x1c] sm:$0xf]
  %v54 = vld [vmem:[%s3 + $0x20] sm:$0xf]
  %v55 = vld [vmem:[%s3 + $0x24] sm:$0xf]
  %v56 = vld [vmem:[%s3 + $0x28] sm:$0xf]
  %v57 = vld [vmem:[%s3 + $0x2c] sm:$0xf]
  %v58 = vld [vmem:[%s3 + $0x30] sm:$0xf]
  %v59 = vld [vmem:[%s3 + $0x34] sm:$0xf]
  %v60 = vld [vmem:[%s3 + $0x38] sm:$0xf]
  %v61 = vld [vmem:[%s3 + $0x3c] sm:$0xf]
  %v62 = vld [vmem:[%s3 + $0x40] sm:$0xf]
  %v63 = vld [vmem:[%s3 + $0x44] sm:$0xf]
  %v64 = vld [vmem:[%s3 + $0x48] sm:$0xf]
  %v65 = vld [vmem:[%s3 + $0x4c] sm:$0xf]
  %v66 = vld [vmem:[%s3 + $0x50] sm:$0xf]
  %v67 = vld [vmem:[%s3 + $0x54] sm:$0xf]
  %v68 = vld [vmem:[%s3 + $0x58] sm:$0xf]
  %v69 = vld [vmem:[%s3 + $0x5c] sm:$0xf]
  %v70 = vld [vmem:[%s4] sm:$0x1]
  %v72 = vlaneseq
  %v73 = vshrl.u32 %v72, 7
  %v74 = vsub.s32 0, %v73
  %v75 = vrot.slane %v70, %v74
  %v79 = vunpack.c.l.b16 %v44
  %v80 = vunpack.c.h.b16 %v44
  %v81 = vunpack.c.l.b16 %v45
  %v82 = vunpack.c.h.b16 %v45
  %v83 = vpack.c.b16 %v81, %v79
  %v84 = vpack.c.b16 %v82, %v80
  %v110 = vunpack.c.l.b16 %v46
  %v111 = vunpack.c.l.b16 %v47
  %v112 = vunpack.c.l.b16 %v48
  %v113 = vunpack.c.l.b16 %v49
  %v114 = vunpack.c.l.b16 %v50
  %v115 = vunpack.c.l.b16 %v51
  %v116 = vunpack.c.l.b16 %v52
  %v117 = vunpack.c.l.b16 %v53
  %v118 = vunpack.c.l.b16 %v54
  %v119 = vunpack.c.l.b16 %v55
  %v120 = vunpack.c.l.b16 %v56
  %v121 = vunpack.c.l.b16 %v57
  %v122 = vunpack.c.l.b16 %v58
  %v123 = vunpack.c.l.b16 %v59
  %v124 = vunpack.c.l.b16 %v60
  %v125 = vunpack.c.l.b16 %v61
  %v126 = vunpack.c.l.b16 %v62
  %v127 = vunpack.c.l.b16 %v63
  %v128 = vunpack.c.l.b16 %v64
  %v129 = vunpack.c.l.b16 %v65
  %v130 = vunpack.c.l.b16 %v66
  %v131 = vunpack.c.l.b16 %v67
  %v132 = vunpack.c.l.b16 %v68
  %v133 = vunpack.c.l.b16 %v69
  %v134 = vpack.c.b16 %v111, %v110
  %v135 = vpack.c.b16 %v113, %v112
  %v136 = vpack.c.b16 %v115, %v114
  %v137 = vpack.c.b16 %v117, %v116
  %v138 = vpack.c.b16 %v119, %v118
  %v139 = vpack.c.b16 %v121, %v120
  %v140 = vpack.c.b16 %v123, %v122
  %v141 = vpack.c.b16 %v125, %v124
  %v142 = vpack.c.b16 %v127, %v126
  %v143 = vpack.c.b16 %v129, %v128
  %v144 = vpack.c.b16 %v131, %v130
  %v145 = vpack.c.b16 %v133, %v132
  %vm158 = vcmask 523264
  %v160 = vsel %vm158, %v84, 0
  %162 = vmatprep.subr.bf16.mxu0 0
  %163 = vmatpush1.bf16.msra.mxu0 %v134
  %164 = vmatprep.subr.bf16.mxu0 0
  %165 = vmatpush1.bf16.msra.mxu0 %v135
  %166 = vmatprep.subr.bf16.mxu0 0
  %167 = vmatpush1.bf16.msra.mxu0 %v136
  %168 = vmatprep.subr.bf16.mxu0 0
  %169 = vmatpush1.bf16.msra.mxu0 %v137
  %170 = vmatprep.subr.bf16.mxu0 0
  %171 = vmatpush1.bf16.msra.mxu0 %v138
  %172 = vmatprep.subr.bf16.mxu0 0
  %173 = vmatpush1.bf16.msra.mxu0 %v139
  %174 = vmatprep.subr.bf16.mxu0 0
  %175 = vmatpush1.bf16.msra.mxu0 %v140
  %176 = vmatprep.subr.bf16.mxu0 0
  %177 = vmatpush1.bf16.msra.mxu0 %v141
  %178 = vmatprep.subr.bf16.mxu0 0
  %179 = vmatpush1.bf16.msra.mxu0 %v142
  %180 = vmatprep.subr.bf16.mxu0 0
  %181 = vmatpush1.bf16.msra.mxu0 %v143
  %182 = vmatprep.subr.bf16.mxu0 0
  %183 = vmatpush1.bf16.msra.mxu0 %v144
  %184 = vmatprep.subr.bf16.mxu0 0
  %185 = vmatpush1.bf16.msra.mxu0 %v145
  %186 = vmatprep.subr.bf16.mxu0 0
  %187 = vmatpush1.bf16.msra.mxu0 0
  %188 = vmatprep.subr.bf16.mxu0 0
  %189 = vmatpush1.bf16.msra.mxu0 0
  %190 = vmatprep.subr.bf16.mxu0 0
  %191 = vmatpush1.bf16.msra.mxu0 0
  %192 = vmatprep.subr.bf16.mxu0 0
  %193 = vmatpush1.bf16.msra.mxu0 0
  %194 = vmatprep.mubr.bf16.mxu0 %v160
  %195 = vmatmul.mubr.bf16.gmra.mrb[0].mxu0 %v83
  %v196 = vpop.f32.mrb[0].mxu0
  %v197 = vadd.f32 %v75, %v196
  %v198 = vpop.f32.mrb[0].mxu0
  %v199 = vpop.f32.mrb[0].mxu0
  %v200 = vadd.f32 %v75, %v199
  %v201 = vpop.f32.mrb[0].mxu0
  %202 = vdwg.mxu0
  %v203 = vmax.f32 %v197, 0.0
  %v204 = vmax.f32 %v200, 0.0
  %v205 = vpack.c.bf16 %v204, %v203
  %v206 = vld [vmem:[%s5] sm:$0xf]
  %v207 = vld [vmem:[%s5 + $0x4] sm:$0xf]
  %v208 = vld [vmem:[%s5 + $0x8] sm:$0xf]
  %v209 = vld [vmem:[%s5 + $0xc] sm:$0xf]
  %v210 = vld [vmem:[%s5 + $0x10] sm:$0xf]
  %v211 = vld [vmem:[%s5 + $0x14] sm:$0xf]
  %v212 = vld [vmem:[%s5 + $0x18] sm:$0xf]
  %v213 = vld [vmem:[%s5 + $0x1c] sm:$0xf]
  %v214 = vld [vmem:[%s6] sm:$0x1]
  %v216 = vlaneseq
  %v217 = vshrl.u32 %v216, 7
  %v218 = vsub.s32 0, %v217
  %v219 = vrot.slane %v214, %v218
  %v229 = vunpack.c.l.b16 %v206
  %v230 = vunpack.c.l.b16 %v207
  %v231 = vunpack.c.l.b16 %v208
  %v232 = vunpack.c.l.b16 %v209
  %v233 = vunpack.c.l.b16 %v210
  %v234 = vunpack.c.l.b16 %v211
  %v235 = vunpack.c.l.b16 %v212
  %v236 = vunpack.c.l.b16 %v213
  %v237 = vpack.c.b16 %v230, %v229
  %v238 = vpack.c.b16 %v232, %v231
  %v239 = vpack.c.b16 %v234, %v233
  %v240 = vpack.c.b16 %v236, %v235
  %v246 = vsel %vm158, %v205, 0
  %248 = vmatprep.subr.bf16.mxu0 0
  %249 = vmatpush1.bf16.msra.mxu0 %v237
  %250 = vmatprep.subr.bf16.mxu0 0
  %251 = vmatpush1.bf16.msra.mxu0 %v238
  %252 = vmatprep.subr.bf16.mxu0 0
  %253 = vmatpush1.bf16.msra.mxu0 %v239
  %254 = vmatprep.subr.bf16.mxu0 0
  %255 = vmatpush1.bf16.msra.mxu0 %v240
  %256 = vmatprep.subr.bf16.mxu0 0
  %257 = vmatpush1.bf16.msra.mxu0 0
  %258 = vmatprep.subr.bf16.mxu0 0
  %259 = vmatpush1.bf16.msra.mxu0 0
  %260 = vmatprep.subr.bf16.mxu0 0
  %261 = vmatpush1.bf16.msra.mxu0 0
  %262 = vmatprep.subr.bf16.mxu0 0
  %263 = vmatpush1.bf16.msra.mxu0 0
  %264 = vmatprep.subr.bf16.mxu0 0
  %265 = vmatpush1.bf16.msra.mxu0 0
  %266 = vmatprep.subr.bf16.mxu0 0
  %267 = vmatpush1.bf16.msra.mxu0 0
  %268 = vmatprep.subr.bf16.mxu0 0
  %269 = vmatpush1.bf16.msra.mxu0 0
  %270 = vmatprep.subr.bf16.mxu0 0
  %271 = vmatpush1.bf16.msra.mxu0 0
  %272 = vmatprep.subr.bf16.mxu0 0
  %273 = vmatpush1.bf16.msra.mxu0 0
  %274 = vmatprep.subr.bf16.mxu0 0
  %275 = vmatpush1.bf16.msra.mxu0 0
  %276 = vmatprep.subr.bf16.mxu0 0
  %277 = vmatpush1.bf16.msra.mxu0 0
  %278 = vmatprep.subr.bf16.mxu0 0
  %279 = vmatpush1.bf16.msra.mxu0 0
  %280 = vmatprep.mubr.bf16.mxu0 0
  %281 = vmatmul.mubr.bf16.gmra.mrb[0].mxu0 %v246
  %v282 = vpop.f32.mrb[0].mxu0
  %v283 = vadd.f32 %v219, %v282
  %v284 = vpop.f32.mrb[0].mxu0
  %v285 = vpop.f32.mrb[0].mxu0
  %v286 = vadd.f32 %v219, %v285
  %v287 = vpop.f32.mrb[0].mxu0
  %288 = vdwg.mxu0
  %v289 = vmax.f32 %v283, 0.0
  %v290 = vmax.f32 %v286, 0.0
  %v291 = vpack.c.bf16 %v290, %v289
  %v292 = vld [vmem:[%s7] sm:$0xf]
  %v293 = vld [vmem:[%s7 + $0x4] sm:$0xf]
  %v294 = vld [vmem:[%s7 + $0x8] sm:$0xf]
  %v295 = vld [vmem:[%s7 + $0xc] sm:$0xf]
  %v296 = vld [vmem:[%s8] sm:$0x1]
  %v298 = vlaneseq
  %v299 = vshrl.u32 %v298, 7
  %v300 = vsub.s32 0, %v299
  %v301 = vrot.slane %v296, %v300
  %v307 = vunpack.c.l.b16 %v292
  %v308 = vunpack.c.l.b16 %v293
  %v309 = vunpack.c.l.b16 %v294
  %v310 = vunpack.c.l.b16 %v295
  %v311 = vpack.c.b16 %v308, %v307
  %v312 = vpack.c.b16 %v310, %v309
  %vm315 = vcmask 261120
  %v317 = vsel %vm315, %v291, 0
  %319 = vmatprep.subr.bf16.mxu0 0
  %320 = vmatpush1.bf16.msra.mxu0 %v311
  %321 = vmatprep.subr.bf16.mxu0 0
  %322 = vmatpush1.bf16.msra.mxu0 %v312
  %323 = vmatprep.subr.bf16.mxu0 0
  %324 = vmatpush1.bf16.msra.mxu0 0
  %325 = vmatprep.subr.bf16.mxu0 0
  %326 = vmatpush1.bf16.msra.mxu0 0
  %327 = vmatprep.subr.bf16.mxu0 0
  %328 = vmatpush1.bf16.msra.mxu0 0
  %329 = vmatprep.subr.bf16.mxu0 0
  %330 = vmatpush1.bf16.msra.mxu0 0
  %331 = vmatprep.subr.bf16.mxu0 0
  %332 = vmatpush1.bf16.msra.mxu0 0
  %333 = vmatprep.subr.bf16.mxu0 0
  %334 = vmatpush1.bf16.msra.mxu0 0
  %335 = vmatprep.subr.bf16.mxu0 0
  %336 = vmatpush1.bf16.msra.mxu0 0
  %337 = vmatprep.subr.bf16.mxu0 0
  %338 = vmatpush1.bf16.msra.mxu0 0
  %339 = vmatprep.subr.bf16.mxu0 0
  %340 = vmatpush1.bf16.msra.mxu0 0
  %341 = vmatprep.subr.bf16.mxu0 0
  %342 = vmatpush1.bf16.msra.mxu0 0
  %343 = vmatprep.subr.bf16.mxu0 0
  %344 = vmatpush1.bf16.msra.mxu0 0
  %345 = vmatprep.subr.bf16.mxu0 0
  %346 = vmatpush1.bf16.msra.mxu0 0
  %347 = vmatprep.subr.bf16.mxu0 0
  %348 = vmatpush1.bf16.msra.mxu0 0
  %349 = vmatprep.subr.bf16.mxu0 0
  %350 = vmatpush1.bf16.msra.mxu0 0
  %351 = vmatprep.mubr.bf16.mxu0 0
  %352 = vmatmul.mubr.bf16.gmra.mrb[0].mxu0 %v317
  %v353 = vpop.f32.mrb[0].mxu0
  %v354 = vadd.f32 %v301, %v353
  %v355 = vpop.f32.mrb[0].mxu0
  %v356 = vpop.f32.mrb[0].mxu0
  %v357 = vadd.f32 %v301, %v356
  %v358 = vpop.f32.mrb[0].mxu0
  %359 = vdwg.mxu0
  %v360 = vmax.f32 %v354, 0.0
  %v361 = vmax.f32 %v357, 0.0
  %v362 = vld [vmem:[%s1] sm:$0xf]
  %v363 = vld [vmem:[%s1 + $0x4] sm:$0xf]
  %v364 = vunpack.c.l.bf16 %v362
  %v365 = vunpack.c.l.bf16 %v363
  %v366 = vld [vmem:[%s2] sm:$0xf]
  %v367 = vld [vmem:[%s2 + $0x4] sm:$0xf]
  %v368 = vunpack.c.l.bf16 %v366
  %v369 = vunpack.c.l.bf16 %v367
  %v370 = vmul.f32 %v364, %v368
  %v371 = vmul.f32 %v365, %v369
  %v372 = vld [vmem:[%s9] sm:$0x1]
  %v374 = vlaneseq
  %v375 = vshrl.u32 %v374, 7
  %v376 = vsub.s32 0, %v375
  %v377 = vrot.slane %v372, %v376
  %v379 = vmul.f32 %v370, %v377
  %v380 = vmul.f32 %v371, %v377
  %v381 = vsel %vm158, %v379, 0.0
  %382 = vadd.xlane.f32.xlu0 %v381
  %v383 = vpop.xlane.xlu0 %382
  %v384 = vsel %vm158, %v380, 0.0
  %385 = vadd.xlane.f32.xlu0 %v384
  %v386 = vpop.xlane.xlu0 %385
  %v387 = vld [vmem:[%s10] sm:$0x1]
  %v389 = vlaneseq
  %v390 = vshrl.u32 %v389, 7
  %v391 = vsub.s32 0, %v390
  %v392 = vrot.slane %v387, %v391
  %v394 = vmul.f32 %v360, %v392
  %v395 = vmul.f32 %v361, %v392
  %vm396 = vcmask 130048
  %v397 = vsel %vm396, %v394, 0.0
  %398 = vadd.xlane.f32.xlu0 %v397
  %v399 = vpop.xlane.xlu0 %398
  %v400 = vsel %vm396, %v395, 0.0
  %401 = vadd.xlane.f32.xlu0 %v400
  %v402 = vpop.xlane.xlu0 %401
  %v403 = vadd.f32 %v383, %v399
  %v404 = vadd.f32 %v386, %v402
  %v405 = vld [vmem:[#allocation2] sm:$0x1]
  %v407 = vlaneseq
  %v408 = vshrl.u32 %v407, 7
  %v409 = vsub.s32 0, %v408
  %v410 = vrot.slane %v405, %v409
  %v412 = vadd.f32 %v403, %v410
  %v413 = vadd.f32 %v404, %v410
  %vm414 = vcmask 7168
  %415 = vst.msk [vmem:[%s12] sm:$0xff] %vm414, %v412
  %416 = vst.msk [vmem:[%s12 + $0x8] sm:$0xff] %vm414, %v413
  // Predicated region
  $region50: #{ncf_server_forward.1} parent=0 // pred_check
    _
  $region51: #{ncf_server_forward.1} parent=0 // pred_check_branch
    %418 = sbr.rel (0) target = $region53
  $region52: #{ncf_server_forward.1} parent=0 // pred_region
    _
  $region53: #{ncf_server_forward.1} parent=0 // pred_fallthru
    _
  // Predicated region
  $region54: #{ncf_server_forward.1} parent=0 // pred_check
    _
  $region55: #{ncf_server_forward.1} parent=0 // pred_check_branch
    %420 = sbr.rel (0) target = $region57
  $region56: #{ncf_server_forward.1} parent=0 // pred_region
    _
  $region57: #{ncf_server_forward.1} parent=0 // pred_fallthru
    _

</llo_original>
